<compile_context>
chip_gen: v5e
topology: v5e:2x2
jax: 0.10.0
libtpu: 0.0.40
codegen_flags: <defaults>
</compile_context>

<pallas_src>
import functools

import jax
import jax.numpy as jnp
from jax import lax
from jax.experimental import pallas as pl
from jax.experimental.pallas import tpu as pltpu

_NCORES = 2                        # parallel grid axis (2 TCs on v7x; harmless elsewhere)
_VMEM_INPUT_BUDGET = 12 * 1024 * 1024   # target bytes for double-buffered input tiles


def _multi_dice_kernel(pred_ref, tgt_ref, msk_ref, expand_ref, cls_ref,
                       inter_ref, union_ref, cnt_ref,
                       *, seq_len, block_l, steps_per_core):
    i = pl.program_id(1)

    @pl.when(i == 0)
    def _init():
        inter_ref[...] = jnp.zeros_like(inter_ref)
        union_ref[...] = jnp.zeros_like(union_ref)
        cnt_ref[...] = jnp.zeros_like(cnt_ref)

    # Intended (unclamped) L-block index.  The index maps clamp the DMA so it
    # never starts past the array; overhang / ragged rows are masked out here.
    s = pl.program_id(0) * steps_per_core + i

    pred = pred_ref[...].astype(jnp.float32)      # [tl, B*C]  lane-dense predict
    tgt = tgt_ref[...].astype(jnp.float32)        # [tl, B]    class ids
    msk = msk_ref[...].astype(jnp.float32)        # [tl, B]
    expand = expand_ref[...]                      # [B, B*C]   0/1 expansion matrix
    cls = cls_ref[...]                            # [1, B*C]   class id of each lane
    tl = pred.shape[0]

    row = s * block_l + lax.broadcasted_iota(jnp.int32, (tl, 1), 0)
    valid = row < seq_len                         # [tl, 1]  bool row-validity mask

    tgt = jnp.where(valid, tgt, -1.0)             # invalid rows: never match a class
    msk = jnp.where(valid, msk, 0.0)              # invalid rows: masked out (NaN-safe)

    # Lane expansion [tl, B] -> [tl, B*C] on the (otherwise idle) MXU:
    #   x_bc[l, b*C + c] = x[l, b]
    tgt_bc = jnp.dot(tgt, expand, preferred_element_type=jnp.float32)
    msk_bc = jnp.dot(msk, expand, preferred_element_type=jnp.float32)

    onehot = cls == tgt_bc                        # [tl, B*C] one-hot as bool
    pm = jnp.where(valid, pred, 0.0) * msk_bc     # predict * mask (NaN-safe on pad rows)

    # Fused single pass: one compare, one multiply, three select-accumulates.
    inter_blk = jnp.sum(jnp.where(onehot, pm, 0.0), axis=0, keepdims=True)
    union_blk = jnp.sum(pm + jnp.where(onehot, msk_bc, 0.0), axis=0, keepdims=True)
    cnt_blk = jnp.sum(jnp.where(onehot, 1.0, 0.0), axis=0, keepdims=True)

    inter_ref[...] += inter_blk[None]             # (1, 1, B*C) accumulators (outputs)
    union_ref[...] += union_blk[None]
    cnt_ref[...] += cnt_blk[None]


def _pick_block_l(L, BC, pred_bytes, tgt_bytes, msk_bytes):
    """Pick block_l from PADDED VMEM bytes (double-buffered inputs)."""
    lane_bc = max(-(-BC // 128) * 128, 128)                 # padded lane width
    row_bytes = lane_bc * pred_bytes + 128 * (tgt_bytes + msk_bytes)
    cap = _VMEM_INPUT_BUDGET // (2 * row_bytes)             # 2x: double buffering
    cap = max(8, min(2048, (cap // 8) * 8))                 # multiple of 8 (sublanes)
    return L if L <= cap else cap


def multi_dice_loss(predict, target, mask, *, eps=1e-5, block_l=None):
    """predict [L, B, C] (post-sigmoid), target [L, B] int, mask [L, B] -> score [B]."""
    L, B, C = predict.shape
    BC = B * C

    # Native-dtype, lane-dense views (reshape of a contiguous array is metadata-only).
    pred2 = predict.reshape(L, BC)
    tgt2 = target if target.dtype == jnp.int32 else target.astype(jnp.int32)
    msk2 = mask                                   # cast to f32 inside the kernel

    if block_l is None:
        block_l = _pick_block_l(L, BC, pred2.dtype.itemsize,
                                tgt2.dtype.itemsize, msk2.dtype.itemsize)
    else:
        if block_l >= L:
            block_l = L
        elif block_l % 8 != 0:
            raise ValueError("block_l must be a multiple of 8 or >= L")

    grid_l = (L + block_l - 1) // block_l          # number of real L-blocks
    steps_per_core = (grid_l + _NCORES - 1) // _NCORES
    grid = (_NCORES, steps_per_core)

    # Tiny constants (built once by XLA, DMA'd into VMEM once, revisited block).
    lane = jnp.arange(BC, dtype=jnp.int32)
    expand = (lane[None, :] // C == jnp.arange(B, dtype=jnp.int32)[:, None])
    expand = expand.astype(jnp.float32)            # [B, BC] : x @ expand replicates per class
    cls = (lane % C).astype(jnp.float32)[None, :]  # [1, BC] : class id of each lane

    def l_block(p, i):
        # Clamp so the DMA stays in bounds; overhang rows are masked in-kernel.
        return (jnp.minimum(p * steps_per_core + i, grid_l - 1), 0)

    const_map = lambda p, i: (0, 0)
    out_map = lambda p, i: (p, 0, 0)

    kernel = functools.partial(_multi_dice_kernel, seq_len=L, block_l=block_l,
                               steps_per_core=steps_per_core)
    out_sds = jax.ShapeDtypeStruct((_NCORES, 1, BC), jnp.float32)

    inter_p, union_p, cnt_p = pl.pallas_call(
        kernel,
        out_shape=(out_sds, out_sds, out_sds),
        grid=grid,
        in_specs=[
            pl.BlockSpec((block_l, BC), l_block),   # predict (native dtype)
            pl.BlockSpec((block_l, B), l_block),    # target ids
            pl.BlockSpec((block_l, B), l_block),    # mask
            pl.BlockSpec((B, BC), const_map),       # expansion matrix
            pl.BlockSpec((1, BC), const_map),       # lane class ids
        ],
        out_specs=(
            pl.BlockSpec((1, 1, BC), out_map),      # per-core partial intersection
            pl.BlockSpec((1, 1, BC), out_map),      # per-core partial union
            pl.BlockSpec((1, 1, BC), out_map),      # per-core partial class counts
        ),
        compiler_params=pltpu.CompilerParams(
            dimension_semantics=("parallel", "arbitrary"),
            vmem_limit_bytes=32 * 1024 * 1024,
        ),
    )(pred2, tgt2, msk2, expand, cls)

    # O(B*C) epilogue in plain JAX (negligible work; enables the parallel L axis).
    inter = inter_p.sum(axis=(0, 1)).reshape(B, C)
    union = union_p.sum(axis=(0, 1)).reshape(B, C)
    cnt = cnt_p.sum(axis=(0, 1)).reshape(B, C)
    wei = 1.0 / (cnt.sum(axis=0) + eps)            # [C]  (unmasked counts, as in ref)
    inter_b = jnp.sum(inter * wei, axis=1)         # [B]
    union_b = jnp.sum(union * wei, axis=1)         # [B]
    return 1.0 - (2.0 * inter_b + eps) / (union_b + eps)


def multi_dice_loss_ref(predict, target, mask, eps=1e-5):
    """Pure-JAX reference mirroring the PyTorch module exactly."""
    C = predict.shape[-1]
    onehot = jax.nn.one_hot(target, C, dtype=jnp.float32)
    m = mask.astype(jnp.float32)[:, :, None]
    wei = 1.0 / (jnp.sum(onehot, axis=(0, 1)) + eps)
    inter = jnp.sum(jnp.sum(predict.astype(jnp.float32) * onehot * m, axis=0) * wei, axis=1)
    union = jnp.sum(jnp.sum((predict.astype(jnp.float32) + onehot) * m, axis=0) * wei, axis=1)
    return 1.0 - (2.0 * inter + eps) / (union + eps)


if __name__ == "__main__":
    key = jax.random.PRNGKey(0)

    # Test 1: single-block path (block_l == L).
    L, B, C = 8, 2, 8
    kp, kt = jax.random.split(key, 2)
    predict = jax.nn.sigmoid(jax.random.normal(kp, (L, B, C), jnp.float32))  # post-sigmoid
    target = jax.random.randint(kt, (L, B), 0, C).astype(jnp.int32)
    lengths = jnp.array([6, 7], jnp.int32)
    mask = (jnp.arange(L)[:, None] < lengths[None, :]).astype(jnp.float32)

    score = multi_dice_loss(predict, target, mask)
    jax.block_until_ready(score)
    ref = multi_dice_loss_ref(predict, target, mask)
    if not jnp.allclose(score, ref, rtol=1e-5, atol=1e-5):
        raise AssertionError(f"mismatch (test 1): kernel={score} ref={ref}")

    # Test 2: multi-step grid with ragged last block + overhang core step
    # (L=20, block_l=8 -> grid_l=3 over a (2, 2) grid).
    L2 = 20
    kp2, kt2 = jax.random.split(jax.random.PRNGKey(1), 2)
    predict2 = jax.nn.sigmoid(jax.random.normal(kp2, (L2, B, C), jnp.float32))
    target2 = jax.random.randint(kt2, (L2, B), 0, C).astype(jnp.int32)
    lengths2 = jnp.array([15, 18], jnp.int32)
    mask2 = (jnp.arange(L2)[:, None] < lengths2[None, :]).astype(jnp.float32)

    score2 = multi_dice_loss(predict2, target2, mask2, block_l=8)
    jax.block_until_ready(score2)
    ref2 = multi_dice_loss_ref(predict2, target2, mask2)
    if not jnp.allclose(score2, ref2, rtol=1e-5, atol=1e-5):
        raise AssertionError(f"mismatch (test 2): kernel={score2} ref={ref2}")

    print("KERNEL_OK")
</pallas_src>

<mosaic_0001>
module attributes {stable_mosaic.version = 11 : i64} {
  func.func @_multi_dice_kernel(%arg0: i32, %arg1: i32, %arg2: memref<8x16xf32, #tpu.memory_space<vmem>>, %arg3: memref<8x2xi32, #tpu.memory_space<vmem>>, %arg4: memref<8x2xf32, #tpu.memory_space<vmem>>, %arg5: memref<2x16xf32, #tpu.memory_space<vmem>>, %arg6: memref<1x16xf32, #tpu.memory_space<vmem>>, %arg7: memref<1x1x16xf32, #tpu.memory_space<vmem>>, %arg8: memref<1x1x16xf32, #tpu.memory_space<vmem>>, %arg9: memref<1x1x16xf32, #tpu.memory_space<vmem>>) attributes {dimension_semantics = [#tpu.dimension_semantics<parallel>, #tpu.dimension_semantics<arbitrary>], iteration_bounds = array<i64: 2, 1>, scalar_prefetch = 0 : i64, scratch_operands = 0 : i64, tpu.core_type = #tpu.core_type<tc>, window_params = [{transform_indices = @transform_0, window_bounds = array<i64: 8, 16>}, {transform_indices = @transform_1, window_bounds = array<i64: 8, 2>}, {transform_indices = @transform_2, window_bounds = array<i64: 8, 2>}, {pipeline_mode = #tpu.pipeline_mode<synchronous>, transform_indices = @transform_3, window_bounds = array<i64: 2, 16>}, {pipeline_mode = #tpu.pipeline_mode<synchronous>, transform_indices = @transform_4, window_bounds = array<i64: 1, 16>}, {transform_indices = @transform_5, window_bounds = array<i64: 1, 1, 16>}, {transform_indices = @transform_6, window_bounds = array<i64: 1, 1, 16>}, {transform_indices = @transform_7, window_bounds = array<i64: 1, 1, 16>}]} {
    %c0_i32 = arith.constant 0 : i32
    %0 = arith.cmpi eq, %arg1, %c0_i32 : i32
    %1 = arith.extui %0 : i1 to i32
    %c0_i32_0 = arith.constant 0 : i32
    %2 = arith.cmpi ne, %1, %c0_i32_0 : i32
    scf.if %2 {
      %cst_40 = arith.constant 0.000000e+00 : f32
      %60 = vector.broadcast %cst_40 : f32 to vector<1x1x16xf32>
      %c0_41 = arith.constant 0 : index
      %c0_42 = arith.constant 0 : index
      %c0_43 = arith.constant 0 : index
      %61 = vector.load %arg7[%c0_41, %c0_42, %c0_43] : memref<1x1x16xf32, #tpu.memory_space<vmem>>, vector<1x1x16xf32>
      tpu.vector_store %arg7[%c0_41, %c0_42, %c0_43], %60 {strides = array<i32>} : memref<1x1x16xf32, #tpu.memory_space<vmem>>, vector<1x1x16xf32>,
      %cst_44 = arith.constant 0.000000e+00 : f32
      %62 = vector.broadcast %cst_44 : f32 to vector<1x1x16xf32>
      %c0_45 = arith.constant 0 : index
      %c0_46 = arith.constant 0 : index
      %c0_47 = arith.constant 0 : index
      %63 = vector.load %arg8[%c0_45, %c0_46, %c0_47] : memref<1x1x16xf32, #tpu.memory_space<vmem>>, vector<1x1x16xf32>
      tpu.vector_store %arg8[%c0_45, %c0_46, %c0_47], %62 {strides = array<i32>} : memref<1x1x16xf32, #tpu.memory_space<vmem>>, vector<1x1x16xf32>,
      %cst_48 = arith.constant 0.000000e+00 : f32
      %64 = vector.broadcast %cst_48 : f32 to vector<1x1x16xf32>
      %c0_49 = arith.constant 0 : index
      %c0_50 = arith.constant 0 : index
      %c0_51 = arith.constant 0 : index
      %65 = vector.load %arg9[%c0_49, %c0_50, %c0_51] : memref<1x1x16xf32, #tpu.memory_space<vmem>>, vector<1x1x16xf32>
      tpu.vector_store %arg9[%c0_49, %c0_50, %c0_51], %64 {strides = array<i32>} : memref<1x1x16xf32, #tpu.memory_space<vmem>>, vector<1x1x16xf32>,
    } else {
    }
    %c1_i32 = arith.constant 1 : i32
    %3 = arith.muli %arg0, %c1_i32 : i32
    %4 = arith.addi %3, %arg1 : i32
    %c0 = arith.constant 0 : index
    %c0_1 = arith.constant 0 : index
    %5 = vector.load %arg2[%c0, %c0_1] : memref<8x16xf32, #tpu.memory_space<vmem>>, vector<8x16xf32>
    %c0_2 = arith.constant 0 : index
    %c0_3 = arith.constant 0 : index
    %6 = vector.load %arg3[%c0_2, %c0_3] : memref<8x2xi32, #tpu.memory_space<vmem>>, vector<8x2xi32>
    %7 = arith.sitofp %6 : vector<8x2xi32> to vector<8x2xf32>
    %c0_4 = arith.constant 0 : index
    %c0_5 = arith.constant 0 : index
    %8 = vector.load %arg4[%c0_4, %c0_5] : memref<8x2xf32, #tpu.memory_space<vmem>>, vector<8x2xf32>
    %c0_6 = arith.constant 0 : index
    %c0_7 = arith.constant 0 : index
    %9 = vector.load %arg5[%c0_6, %c0_7] : memref<2x16xf32, #tpu.memory_space<vmem>>, vector<2x16xf32>
    %c0_8 = arith.constant 0 : index
    %c0_9 = arith.constant 0 : index
    %10 = vector.load %arg6[%c0_8, %c0_9] : memref<1x16xf32, #tpu.memory_space<vmem>>, vector<1x16xf32>
    %c8_i32 = arith.constant 8 : i32
    %11 = arith.muli %4, %c8_i32 : i32
    %12 = tpu.iota {dimensions = array<i32: 0>} : vector<8x1xi32>
    %13 = vector.broadcast %11 : i32 to vector<8x1xi32>
    %14 = arith.addi %13, %12 : vector<8x1xi32>
    %c8_i32_10 = arith.constant 8 : i32
    %15 = vector.broadcast %c8_i32_10 : i32 to vector<8x1xi32>
    %16 = arith.cmpi slt, %14, %15 : vector<8x1xi32>
    %cst = arith.constant -1.000000e+00 : f32
    %17 = vector.shape_cast %16 : vector<8x1xi1> to vector<8x1xi1>
    %18 = vector.broadcast %17 : vector<8x1xi1> to vector<8x2xi1>
    %19 = vector.broadcast %cst : f32 to vector<8x2xf32>
    %20 = arith.select %18, %7, %19 : vector<8x2xi1>, vector<8x2xf32>
    %cst_11 = arith.constant 0.000000e+00 : f32
    %21 = vector.shape_cast %16 : vector<8x1xi1> to vector<8x1xi1>
    %22 = vector.broadcast %21 : vector<8x1xi1> to vector<8x2xi1>
    %23 = vector.broadcast %cst_11 : f32 to vector<8x2xf32>
    %24 = arith.select %22, %8, %23 : vector<8x2xi1>, vector<8x2xf32>
    %cst_12 = arith.constant dense<0.000000e+00> : vector<8x16xf32>
    %25 = tpu.matmul %20, %9, %cst_12 {dimension_numbers = #tpu.dot_dimension_numbers<[1], [0], [0], [1], [0, 0, 1, 1], [], []>} : vector<8x2xf32>, vector<2x16xf32>, vector<8x16xf32> -> vector<8x16xf32>
    %cst_13 = arith.constant dense<0.000000e+00> : vector<8x16xf32>
    %26 = tpu.matmul %24, %9, %cst_13 {dimension_numbers = #tpu.dot_dimension_numbers<[1], [0], [0], [1], [0, 0, 1, 1], [], []>} : vector<8x2xf32>, vector<2x16xf32>, vector<8x16xf32> -> vector<8x16xf32>
    %27 = vector.broadcast %10 : vector<1x16xf32> to vector<8x16xf32>
    %28 = arith.cmpf oeq, %27, %25 : vector<8x16xf32>
    %cst_14 = arith.constant 0.000000e+00 : f32
    %29 = vector.shape_cast %16 : vector<8x1xi1> to vector<8x1xi1>
    %30 = vector.broadcast %29 : vector<8x1xi1> to vector<8x16xi1>
    %31 = vector.broadcast %cst_14 : f32 to vector<8x16xf32>
    %32 = arith.select %30, %5, %31 : vector<8x16xi1>, vector<8x16xf32>
    %33 = arith.mulf %32, %26 : vector<8x16xf32>
    %cst_15 = arith.constant 0.000000e+00 : f32
    %34 = vector.broadcast %cst_15 : f32 to vector<8x16xf32>
    %35 = arith.select %28, %33, %34 : vector<8x16xi1>, vector<8x16xf32>
    %cst_16 = arith.constant dense<0.000000e+00> : vector<16xf32>
    %36 = vector.multi_reduction <add>, %35, %cst_16 [0] : vector<8x16xf32> to vector<16xf32>
    %37 = vector.shape_cast %36 : vector<16xf32> to vector<1x16xf32>
    %cst_17 = arith.constant 0.000000e+00 : f32
    %38 = vector.broadcast %cst_17 : f32 to vector<8x16xf32>
    %39 = arith.select %28, %26, %38 : vector<8x16xi1>, vector<8x16xf32>
    %40 = arith.addf %33, %39 : vector<8x16xf32>
    %cst_18 = arith.constant dense<0.000000e+00> : vector<16xf32>
    %41 = vector.multi_reduction <add>, %40, %cst_18 [0] : vector<8x16xf32> to vector<16xf32>
    %42 = vector.shape_cast %41 : vector<16xf32> to vector<1x16xf32>
    %cst_19 = arith.constant 1.000000e+00 : f32
    %cst_20 = arith.constant 0.000000e+00 : f32
    %43 = vector.broadcast %cst_19 : f32 to vector<8x16xf32>
    %44 = vector.broadcast %cst_20 : f32 to vector<8x16xf32>
    %45 = arith.select %28, %43, %44 : vector<8x16xi1>, vector<8x16xf32>
    %cst_21 = arith.constant dense<0.000000e+00> : vector<16xf32>
    %46 = vector.multi_reduction <add>, %45, %cst_21 [0] : vector<8x16xf32> to vector<16xf32>
    %47 = vector.shape_cast %46 : vector<16xf32> to vector<1x16xf32>
    %c0_22 = arith.constant 0 : index
    %c0_23 = arith.constant 0 : index
    %c0_24 = arith.constant 0 : index
    %48 = vector.load %arg7[%c0_22, %c0_23, %c0_24] : memref<1x1x16xf32, #tpu.memory_space<vmem>>, vector<1x1x16xf32>
    %49 = vector.shape_cast %37 : vector<1x16xf32> to vector<1x1x16xf32>
    %50 = arith.addf %48, %49 : vector<1x1x16xf32>
    %c0_25 = arith.constant 0 : index
    %c0_26 = arith.constant 0 : index
    %c0_27 = arith.constant 0 : index
    %51 = vector.load %arg7[%c0_25, %c0_26, %c0_27] : memref<1x1x16xf32, #tpu.memory_space<vmem>>, vector<1x1x16xf32>
    tpu.vector_store %arg7[%c0_25, %c0_26, %c0_27], %50 {strides = array<i32>} : memref<1x1x16xf32, #tpu.memory_space<vmem>>, vector<1x1x16xf32>,
    %c0_28 = arith.constant 0 : index
    %c0_29 = arith.constant 0 : index
    %c0_30 = arith.constant 0 : index
    %52 = vector.load %arg8[%c0_28, %c0_29, %c0_30] : memref<1x1x16xf32, #tpu.memory_space<vmem>>, vector<1x1x16xf32>
    %53 = vector.shape_cast %42 : vector<1x16xf32> to vector<1x1x16xf32>
    %54 = arith.addf %52, %53 : vector<1x1x16xf32>
    %c0_31 = arith.constant 0 : index
    %c0_32 = arith.constant 0 : index
    %c0_33 = arith.constant 0 : index
    %55 = vector.load %arg8[%c0_31, %c0_32, %c0_33] : memref<1x1x16xf32, #tpu.memory_space<vmem>>, vector<1x1x16xf32>
    tpu.vector_store %arg8[%c0_31, %c0_32, %c0_33], %54 {strides = array<i32>} : memref<1x1x16xf32, #tpu.memory_space<vmem>>, vector<1x1x16xf32>,
    %c0_34 = arith.constant 0 : index
    %c0_35 = arith.constant 0 : index
    %c0_36 = arith.constant 0 : index
    %56 = vector.load %arg9[%c0_34, %c0_35, %c0_36] : memref<1x1x16xf32, #tpu.memory_space<vmem>>, vector<1x1x16xf32>
    %57 = vector.shape_cast %47 : vector<1x16xf32> to vector<1x1x16xf32>
    %58 = arith.addf %56, %57 : vector<1x1x16xf32>
    %c0_37 = arith.constant 0 : index
    %c0_38 = arith.constant 0 : index
    %c0_39 = arith.constant 0 : index
    %59 = vector.load %arg9[%c0_37, %c0_38, %c0_39] : memref<1x1x16xf32, #tpu.memory_space<vmem>>, vector<1x1x16xf32>
    tpu.vector_store %arg9[%c0_37, %c0_38, %c0_39], %58 {strides = array<i32>} : memref<1x1x16xf32, #tpu.memory_space<vmem>>, vector<1x1x16xf32>,
    return
  }
  func.func @transform_0(%arg0: i32, %arg1: i32) -> (i32, i32) {
    %c1_i32 = arith.constant 1 : i32
    %0 = arith.muli %arg0, %c1_i32 : i32
    %1 = arith.addi %0, %arg1 : i32
    %c0_i32 = arith.constant 0 : i32
    %2 = arith.minsi %1, %c0_i32 : i32
    %c0_i32_0 = arith.constant 0 : i32
    %c0_i32_1 = arith.constant 0 : i32
    return %2, %c0_i32_0 : i32, i32
  }
  func.func @transform_1(%arg0: i32, %arg1: i32) -> (i32, i32) {
    %c1_i32 = arith.constant 1 : i32
    %0 = arith.muli %arg0, %c1_i32 : i32
    %1 = arith.addi %0, %arg1 : i32
    %c0_i32 = arith.constant 0 : i32
    %2 = arith.minsi %1, %c0_i32 : i32
    %c0_i32_0 = arith.constant 0 : i32
    %c0_i32_1 = arith.constant 0 : i32
    return %2, %c0_i32_0 : i32, i32
  }
  func.func @transform_2(%arg0: i32, %arg1: i32) -> (i32, i32) {
    %c1_i32 = arith.constant 1 : i32
    %0 = arith.muli %arg0, %c1_i32 : i32
    %1 = arith.addi %0, %arg1 : i32
    %c0_i32 = arith.constant 0 : i32
    %2 = arith.minsi %1, %c0_i32 : i32
    %c0_i32_0 = arith.constant 0 : i32
    %c0_i32_1 = arith.constant 0 : i32
    return %2, %c0_i32_0 : i32, i32
  }
  func.func @transform_3(%arg0: i32, %arg1: i32) -> (i32, i32) {
    %c0_i32 = arith.constant 0 : i32
    %c0_i32_0 = arith.constant 0 : i32
    %c0_i32_1 = arith.constant 0 : i32
    return %c0_i32, %c0_i32_0 : i32, i32
  }
  func.func @transform_4(%arg0: i32, %arg1: i32) -> (i32, i32) {
    %c0_i32 = arith.constant 0 : i32
    %c0_i32_0 = arith.constant 0 : i32
    %c0_i32_1 = arith.constant 0 : i32
    return %c0_i32, %c0_i32_0 : i32, i32
  }
  func.func @transform_5(%arg0: i32, %arg1: i32) -> (i32, i32, i32) {
    %c0_i32 = arith.constant 0 : i32
    %c0_i32_0 = arith.constant 0 : i32
    %c0_i32_1 = arith.constant 0 : i32
    return %arg0, %c0_i32, %c0_i32_0 : i32, i32, i32
  }
  func.func @transform_6(%arg0: i32, %arg1: i32) -> (i32, i32, i32) {
    %c0_i32 = arith.constant 0 : i32
    %c0_i32_0 = arith.constant 0 : i32
    %c0_i32_1 = arith.constant 0 : i32
    return %arg0, %c0_i32, %c0_i32_0 : i32, i32, i32
  }
  func.func @transform_7(%arg0: i32, %arg1: i32) -> (i32, i32, i32) {
    %c0_i32 = arith.constant 0 : i32
    %c0_i32_0 = arith.constant 0 : i32
    %c0_i32_1 = arith.constant 0 : i32
    return %arg0, %c0_i32, %c0_i32_0 : i32, i32, i32
  }
}

</mosaic_0001>

<llo_original>
// kernel: tpu_custom_call.1
$region0: #{tpu_custom_call.1}
  #allocation0 [shape = 'u32[]', space=smem, size = 0x4, offset = 0x4, fixed_abs, tag = 'smem constant byte address 0x4 - core index']
  #allocation1 [shape = 'u32[72,128]{1,0:T(1,128)}', space=vmem, size = 0x9000, scoped, tag = 'internal scratch']
  %s0 = inlined_call_operand.vmem [shape: f32[8,16], index: 0, kind: input, shape index: {}]
  %s1 = inlined_call_operand.vmem [shape: s32[8,2], index: 1, kind: input, shape index: {}]
  %s2 = inlined_call_operand.vmem [shape: f32[8,2], index: 2, kind: input, shape index: {}]
  %s3 = inlined_call_operand.vmem [shape: f32[2,16], index: 3, kind: input, shape index: {}]
  %s4 = inlined_call_operand.vmem [shape: f32[1,16], index: 4, kind: input, shape index: {}]
  %s5 = inlined_call_operand.hbm [shape: f32[2,1,16], index: 5, kind: output, shape index: {0}]
  %s6 = inlined_call_operand.hbm [shape: f32[2,1,16], index: 6, kind: output, shape index: {1}]
  %s7 = inlined_call_operand.hbm [shape: f32[2,1,16], index: 7, kind: output, shape index: {2}]
  %8 = xla_tuple %s5, %s6, %s7
  %s9 = sld [smem:[#allocation0]]
  $region73: #{tpu_custom_call.1} parent=0
    _
  %s11 = ssub.s32 1, %s9
  %s12 = scalar_select 0, %s11, %s9
  $region1: #{tpu_custom_call.1} parent=0
    #allocation2 [shape = 'u8[1024]{0}', space=vmem, size = 0x400, scoped, tag = 'output window, operand 0']
    #allocation3 [shape = 's32[2]{0}', space=sflag, size = 0x8, scoped, tag = 'scoped memory for tpu_custom_call.1']
    #allocation4 [shape = 'u8[1024]{0}', space=vmem, size = 0x400, scoped, tag = 'output window, operand 1']
    #allocation5 [shape = 's32[2]{0}', space=sflag, size = 0x8, scoped, tag = 'scoped memory for tpu_custom_call.1']
    #allocation6 [shape = 'u8[1024]{0}', space=vmem, size = 0x400, scoped, tag = 'output window, operand 2']
    %13 = vsyncpa [#allocation3], 0
    %s14 = scalar_lea.sflag [#allocation3], 1
    %15 = vsyncpa %s14, 0
    %16 = vsyncpa [#allocation5], 0
    %s17 = scalar_lea.sflag [#allocation5], 1
    %18 = vsyncpa %s17, 0
    loop: start=0, step=1, limit=4
    $region2: #{tpu_custom_call.1} parent=1 // loop_pre_header
      _
    $region3: #{tpu_custom_call.1} parent=1 // loop_header
      %s20 = sphi 0, %s24
      %p21 = scmp.ge.s32.totalorder %s20, 4
      %s27 = sphi 0, %s39
      %s28 = sphi 0, %s35
      %s29 = sphi 0, %s27
      %s30 = sphi 0, %s28
      %s31 = sphi 0, %s29
      %s32 = sphi 0, %s30
      %s48 = sphi 0, %s50
      %s51 = sphi 0, %s48
      %s52 = sphi 0, %s51
      %s68 = sphi 0, %s52
      %s80 = sphi 0, %s82
      %s83 = sphi 0, %s80
      %s84 = sphi 0, %s83
      %s100 = sphi 0, %s84
      %s112 = sphi 0, %s114
      %s115 = sphi 0, %s112
      %s116 = sphi 0, %s115
      %s132 = sphi 0, %s116
      %s136 = sphi 0, %s136
      %s138 = sphi 0, %s136
      %s139 = sphi 0, %s138
      %s153 = sphi 0, %s139
      %s157 = sphi 0, %s157
      %s159 = sphi 0, %s157
      %s160 = sphi 0, %s159
      %s174 = sphi 0, %s160
      %s180 = sphi 0, %s182
      %s183 = sphi 0, %s180
      %s184 = sphi 0, %s183
      %s200 = sphi 0, %s184
      %s206 = sphi 0, %s208
      %s209 = sphi 0, %s206
      %s210 = sphi 0, %s209
      %s226 = sphi 0, %s210
      %s232 = sphi 0, %s234
      %s235 = sphi 0, %s232
      %s236 = sphi 0, %s235
      %s252 = sphi 0, %s236
    $region4: #{tpu_custom_call.1} parent=1 // loop_header_branch
      %23 = sbr.rel (%p21) target = $region8
    $region5: #{tpu_custom_call.1} parent=1 // loop_body
      %s25 = ssub.s32 %s20, 1
      %s26 = ssub.s32 %s20, 2
      %s33 = sadd.s32 1, %s28
      %p34 = scmp.ge.s32.totalorder %s33, 1
      %s35 = scalar_select %p34, 0, %s33
      %s36 = sadd.s32 1, %s27
      %s37 = scalar_select %p34, %s36, %s27
      %p38 = scmp.ge.s32.totalorder %s37, 2
      %s39 = scalar_select %p38, 0, %s37
      %s40 = sadd.s32 %s27, %s28
      %p41 = scmp.lt.s32.totalorder %s40, 0
      %s42 = scalar_select %p41, %s40, 0
      %s43 = sadd.s32 %s39, %s35
      %p44 = scmp.lt.s32.totalorder %s43, 0
      %s45 = scalar_select %p44, %s43, 0
      %s46 = ssub.s32 %s42, %s45
      %p47 = scmp.eq.s32.totalorder %s46, 0
      %s49 = sadd.s32 %s48, 1
      %s50 = scalar_select %p47, %s48, %s49
      %p53 = pneg %p47
      %p54 = scmp.eq.s32.totalorder %s20, 1
      %p55 = por %p53, %p54
      %p56 = scmp.ne.s32.totalorder %s48, %s51
      %p57 = scmp.eq.s32.totalorder %s20, 0
      %p58 = por %p56, %p57
      %p59 = scmp.ne.s32.totalorder %s48, %s51
      %p60 = scmp.eq.s32.totalorder %s25, 1
      %p61 = por %p59, %p60
      %p62 = scmp.ne.s32.totalorder %s51, %s52
      %p63 = scmp.eq.s32.totalorder %s25, 0
      %p64 = por %p62, %p63
      %p65 = scmp.ne.s32.totalorder %s51, %s52
      %p66 = scmp.eq.s32.totalorder %s26, 1
      %p67 = por %p65, %p66
      %p69 = scmp.ne.s32.totalorder %s52, %s68
      %p70 = scmp.eq.s32.totalorder %s26, 0
      %p71 = por %p69, %p70
      %s72 = sadd.s32 %s27, %s28
      %p73 = scmp.lt.s32.totalorder %s72, 0
      %s74 = scalar_select %p73, %s72, 0
      %s75 = sadd.s32 %s39, %s35
      %p76 = scmp.lt.s32.totalorder %s75, 0
      %s77 = scalar_select %p76, %s75, 0
      %s78 = ssub.s32 %s74, %s77
      %p79 = scmp.eq.s32.totalorder %s78, 0
      %s81 = sadd.s32 %s80, 1
      %s82 = scalar_select %p79, %s80, %s81
      %p85 = pneg %p79
      %p86 = scmp.eq.s32.totalorder %s20, 1
      %p87 = por %p85, %p86
      %p88 = scmp.ne.s32.totalorder %s80, %s83
      %p89 = scmp.eq.s32.totalorder %s20, 0
      %p90 = por %p88, %p89
      %p91 = scmp.ne.s32.totalorder %s80, %s83
      %p92 = scmp.eq.s32.totalorder %s25, 1
      %p93 = por %p91, %p92
      %p94 = scmp.ne.s32.totalorder %s83, %s84
      %p95 = scmp.eq.s32.totalorder %s25, 0
      %p96 = por %p94, %p95
      %p97 = scmp.ne.s32.totalorder %s83, %s84
      %p98 = scmp.eq.s32.totalorder %s26, 1
      %p99 = por %p97, %p98
      %p101 = scmp.ne.s32.totalorder %s84, %s100
      %p102 = scmp.eq.s32.totalorder %s26, 0
      %p103 = por %p101, %p102
      %s104 = sadd.s32 %s27, %s28
      %p105 = scmp.lt.s32.totalorder %s104, 0
      %s106 = scalar_select %p105, %s104, 0
      %s107 = sadd.s32 %s39, %s35
      %p108 = scmp.lt.s32.totalorder %s107, 0
      %s109 = scalar_select %p108, %s107, 0
      %s110 = ssub.s32 %s106, %s109
      %p111 = scmp.eq.s32.totalorder %s110, 0
      %s113 = sadd.s32 %s112, 1
      %s114 = scalar_select %p111, %s112, %s113
      %p117 = pneg %p111
      %p118 = scmp.eq.s32.totalorder %s20, 1
      %p119 = por %p117, %p118
      %p120 = scmp.ne.s32.totalorder %s112, %s115
      %p121 = scmp.eq.s32.totalorder %s20, 0
      %p122 = por %p120, %p121
      %p123 = scmp.ne.s32.totalorder %s112, %s115
      %p124 = scmp.eq.s32.totalorder %s25, 1
      %p125 = por %p123, %p124
      %p126 = scmp.ne.s32.totalorder %s115, %s116
      %p127 = scmp.eq.s32.totalorder %s25, 0
      %p128 = por %p126, %p127
      %p129 = scmp.ne.s32.totalorder %s115, %s116
      %p130 = scmp.eq.s32.totalorder %s26, 1
      %p131 = por %p129, %p130
      %p133 = scmp.ne.s32.totalorder %s116, %s132
      %p134 = scmp.eq.s32.totalorder %s26, 0
      %p135 = por %p133, %p134
      %s137 = sadd.s32 %s136, 1
      %p140 = scmp.eq.s32.totalorder %s20, 1
      %p141 = scmp.ne.s32.totalorder %s136, %s138
      %p142 = scmp.eq.s32.totalorder %s20, 0
      %p143 = por %p141, %p142
      %p144 = scmp.ne.s32.totalorder %s136, %s138
      %p145 = scmp.eq.s32.totalorder %s25, 1
      %p146 = por %p144, %p145
      %p147 = scmp.ne.s32.totalorder %s138, %s139
      %p148 = scmp.eq.s32.totalorder %s25, 0
      %p149 = por %p147, %p148
      %p150 = scmp.ne.s32.totalorder %s138, %s139
      %p151 = scmp.eq.s32.totalorder %s26, 1
      %p152 = por %p150, %p151
      %p154 = scmp.ne.s32.totalorder %s139, %s153
      %p155 = scmp.eq.s32.totalorder %s26, 0
      %p156 = por %p154, %p155
      %s158 = sadd.s32 %s157, 1
      %p161 = scmp.eq.s32.totalorder %s20, 1
      %p162 = scmp.ne.s32.totalorder %s157, %s159
      %p163 = scmp.eq.s32.totalorder %s20, 0
      %p164 = por %p162, %p163
      %p165 = scmp.ne.s32.totalorder %s157, %s159
      %p166 = scmp.eq.s32.totalorder %s25, 1
      %p167 = por %p165, %p166
      %p168 = scmp.ne.s32.totalorder %s159, %s160
      %p169 = scmp.eq.s32.totalorder %s25, 0
      %p170 = por %p168, %p169
      %p171 = scmp.ne.s32.totalorder %s159, %s160
      %p172 = scmp.eq.s32.totalorder %s26, 1
      %p173 = por %p171, %p172
      %p175 = scmp.ne.s32.totalorder %s160, %s174
      %p176 = scmp.eq.s32.totalorder %s26, 0
      %p177 = por %p175, %p176
      %s178 = ssub.s32 %s27, %s39
      %p179 = scmp.eq.s32.totalorder %s178, 0
      %s181 = sadd.s32 %s180, 1
      %s182 = scalar_select %p179, %s180, %s181
      %p185 = pneg %p179
      %p186 = scmp.eq.s32.totalorder %s20, 1
      %p187 = por %p185, %p186
      %p188 = scmp.ne.s32.totalorder %s180, %s183
      %p189 = scmp.eq.s32.totalorder %s20, 0
      %p190 = por %p188, %p189
      %p191 = scmp.ne.s32.totalorder %s180, %s183
      %p192 = scmp.eq.s32.totalorder %s25, 1
      %p193 = por %p191, %p192
      %p194 = scmp.ne.s32.totalorder %s183, %s184
      %p195 = scmp.eq.s32.totalorder %s25, 0
      %p196 = por %p194, %p195
      %p197 = scmp.ne.s32.totalorder %s183, %s184
      %p198 = scmp.eq.s32.totalorder %s26, 1
      %p199 = por %p197, %p198
      %p201 = scmp.ne.s32.totalorder %s184, %s200
      %p202 = scmp.eq.s32.totalorder %s26, 0
      %p203 = por %p201, %p202
      %s204 = ssub.s32 %s27, %s39
      %p205 = scmp.eq.s32.totalorder %s204, 0
      %s207 = sadd.s32 %s206, 1
      %s208 = scalar_select %p205, %s206, %s207
      %p211 = pneg %p205
      %p212 = scmp.eq.s32.totalorder %s20, 1
      %p213 = por %p211, %p212
      %p214 = scmp.ne.s32.totalorder %s206, %s209
      %p215 = scmp.eq.s32.totalorder %s20, 0
      %p216 = por %p214, %p215
      %p217 = scmp.ne.s32.totalorder %s206, %s209
      %p218 = scmp.eq.s32.totalorder %s25, 1
      %p219 = por %p217, %p218
      %p220 = scmp.ne.s32.totalorder %s209, %s210
      %p221 = scmp.eq.s32.totalorder %s25, 0
      %p222 = por %p220, %p221
      %p223 = scmp.ne.s32.totalorder %s209, %s210
      %p224 = scmp.eq.s32.totalorder %s26, 1
      %p225 = por %p223, %p224
      %p227 = scmp.ne.s32.totalorder %s210, %s226
      %p228 = scmp.eq.s32.totalorder %s26, 0
      %p229 = por %p227, %p228
      %s230 = ssub.s32 %s27, %s39
      %p231 = scmp.eq.s32.totalorder %s230, 0
      %s233 = sadd.s32 %s232, 1
      %s234 = scalar_select %p231, %s232, %s233
      %p237 = pneg %p231
      %p238 = scmp.eq.s32.totalorder %s20, 1
      %p239 = por %p237, %p238
      %p240 = scmp.ne.s32.totalorder %s232, %s235
      %p241 = scmp.eq.s32.totalorder %s20, 0
      %p242 = por %p240, %p241
      %p243 = scmp.ne.s32.totalorder %s232, %s235
      %p244 = scmp.eq.s32.totalorder %s25, 1
      %p245 = por %p243, %p244
      %p246 = scmp.ne.s32.totalorder %s235, %s236
      %p247 = scmp.eq.s32.totalorder %s25, 0
      %p248 = por %p246, %p247
      %p249 = scmp.ne.s32.totalorder %s235, %s236
      %p250 = scmp.eq.s32.totalorder %s26, 1
      %p251 = por %p249, %p250
      %p253 = scmp.ne.s32.totalorder %s236, %s252
      %p254 = scmp.eq.s32.totalorder %s26, 0
      %p255 = por %p253, %p254
      %p256 = scmp.le.s32.totalorder 1, %s20
      %p257 = scmp.lt.s32.totalorder %s20, 3
      %p258 = pnand %p256, %p257
      %p259 = pneg %p258
      // Predicated region
      $region9: #{tpu_custom_call.1} parent=5 // pred_check
        _
      $region10: #{tpu_custom_call.1} parent=5 // pred_check_branch
        %261 = sbr.rel (%p258) target = $region12
      $region11: #{tpu_custom_call.1} parent=5 // pred_region
        %s262 = ssub.s32 %s20, 1
        // Predicated region
        $region13: #{tpu_custom_call.1} parent=11 // pred_check
          %p263 = pneg %p149
        $region14: #{tpu_custom_call.1} parent=11 // pred_check_branch
          %265 = sbr.rel (%p263) target = $region16
        $region15: #{tpu_custom_call.1} parent=11 // pred_region
          _
        $region16: #{tpu_custom_call.1} parent=11 // pred_fallthru
          _
        // Predicated region
        $region17: #{tpu_custom_call.1} parent=11 // pred_check
          %p266 = pneg %p170
        $region18: #{tpu_custom_call.1} parent=11 // pred_check_branch
          %268 = sbr.rel (%p266) target = $region20
        $region19: #{tpu_custom_call.1} parent=11 // pred_region
          _
        $region20: #{tpu_custom_call.1} parent=11 // pred_fallthru
          _
      $region12: #{tpu_custom_call.1} parent=5 // pred_fallthru
        _
      %p269 = scmp.lt.s32.totalorder %s20, 2
      // Predicated region
      $region21: #{tpu_custom_call.1} parent=5 // pred_check
        %p270 = pneg %p269
      $region22: #{tpu_custom_call.1} parent=5 // pred_check_branch
        %272 = sbr.rel (%p270) target = $region24
      $region23: #{tpu_custom_call.1} parent=5 // pred_region
        // Predicated region
        $region25: #{tpu_custom_call.1} parent=23 // pred_check
          %p273 = pneg %p58
        $region26: #{tpu_custom_call.1} parent=23 // pred_check_branch
          %275 = sbr.rel (%p273) target = $region28
        $region27: #{tpu_custom_call.1} parent=23 // pred_region
          %s276 = sadd.s32 %s27, %s28
          %p277 = scmp.lt.s32.totalorder %s276, 0
          %s278 = scalar_select %p277, %s276, 0
          %p279 = scmp.lt.s32.totalorder %s278, 0
          %s280 = scalar_select %p279, %s278, 0
          %s281 = smul.addr %s280, 8
          %s282 = scalar_lea.vmem %s0, %s281
          %s283 = sadd.s32 %s27, %s28
          %p284 = scmp.lt.s32.totalorder %s283, 0
          %s285 = scalar_select %p284, %s283, 0
        $region28: #{tpu_custom_call.1} parent=23 // pred_fallthru
          _
        // Predicated region
        $region29: #{tpu_custom_call.1} parent=23 // pred_check
          %p286 = pneg %p90
        $region30: #{tpu_custom_call.1} parent=23 // pred_check_branch
          %288 = sbr.rel (%p286) target = $region32
        $region31: #{tpu_custom_call.1} parent=23 // pred_region
          %s289 = sadd.s32 %s27, %s28
          %p290 = scmp.lt.s32.totalorder %s289, 0
          %s291 = scalar_select %p290, %s289, 0
          %p292 = scmp.lt.s32.totalorder %s291, 0
          %s293 = scalar_select %p292, %s291, 0
          %s294 = smul.addr %s293, 8
          %s295 = scalar_lea.vmem %s1, %s294
          %s296 = sadd.s32 %s27, %s28
          %p297 = scmp.lt.s32.totalorder %s296, 0
          %s298 = scalar_select %p297, %s296, 0
        $region32: #{tpu_custom_call.1} parent=23 // pred_fallthru
          _
        // Predicated region
        $region33: #{tpu_custom_call.1} parent=23 // pred_check
          %p299 = pneg %p122
        $region34: #{tpu_custom_call.1} parent=23 // pred_check_branch
          %301 = sbr.rel (%p299) target = $region36
        $region35: #{tpu_custom_call.1} parent=23 // pred_region
          %s302 = sadd.s32 %s27, %s28
          %p303 = scmp.lt.s32.totalorder %s302, 0
          %s304 = scalar_select %p303, %s302, 0
          %p305 = scmp.lt.s32.totalorder %s304, 0
          %s306 = scalar_select %p305, %s304, 0
          %s307 = smul.addr %s306, 8
          %s308 = scalar_lea.vmem %s2, %s307
          %s309 = sadd.s32 %s27, %s28
          %p310 = scmp.lt.s32.totalorder %s309, 0
          %s311 = scalar_select %p310, %s309, 0
        $region36: #{tpu_custom_call.1} parent=23 // pred_fallthru
          _
      $region24: #{tpu_custom_call.1} parent=5 // pred_fallthru
        _
      %p312 = scmp.le.s32.totalorder 1, %s20
      %p313 = scmp.lt.s32.totalorder %s20, 3
      %p314 = pnand %p312, %p313
      %p315 = pneg %p314
      // Predicated region
      $region37: #{tpu_custom_call.1} parent=5 // pred_check
        _
      $region38: #{tpu_custom_call.1} parent=5 // pred_check_branch
        %317 = sbr.rel (%p314) target = $region40
      $region39: #{tpu_custom_call.1} parent=5 // pred_region
        %s318 = ssub.s32 %s20, 1
        %s319 = sadd.s32 %s29, %s30
        %p320 = scmp.lt.s32.totalorder %s319, 0
        %s321 = scalar_select %p320, %s319, 0
        %p322 = scmp.lt.s32.totalorder %s321, 0
        %s323 = scalar_select %p322, %s321, 0
        %s324 = smul.addr %s323, 8
        %s325 = scalar_lea.vmem %s0, %s324
        %p326 = pneg %p64
        %p327 = pneg %p61
        %s328 = sadd.s32 %s29, %s30
        %p329 = scmp.lt.s32.totalorder %s328, 0
        %s330 = scalar_select %p329, %s328, 0
        %p331 = scmp.lt.s32.totalorder %s330, 0
        %s332 = scalar_select %p331, %s330, 0
        %s333 = smul.addr %s332, 8
        %s334 = scalar_lea.vmem %s1, %s333
        %p335 = pneg %p96
        %p336 = pneg %p93
        %s337 = sadd.s32 %s29, %s30
        %p338 = scmp.lt.s32.totalorder %s337, 0
        %s339 = scalar_select %p338, %s337, 0
        %p340 = scmp.lt.s32.totalorder %s339, 0
        %s341 = scalar_select %p340, %s339, 0
        %s342 = smul.addr %s341, 8
        %s343 = scalar_lea.vmem %s2, %s342
        %p344 = pneg %p128
        %p345 = pneg %p125
        %p346 = pneg %p149
        %p347 = pneg %p146
        %p348 = pneg %p170
        %p349 = pneg %p167
        %p350 = pneg %p196
        %p351 = pneg %p193
        %s352 = sand.u32 %s183, 1
        %s353 = scalar_lea.sflag [#allocation3], %s352
        %s354 = sand.u32 %s183, 1
        %s355 = scalar_lea.vmem [#allocation2], %s354
        %p356 = pneg %p222
        %p357 = pneg %p219
        %s358 = sand.u32 %s25, 1
        %s359 = scalar_lea.sflag [#allocation5], %s358
        %s360 = sand.u32 %s209, 1
        %s361 = scalar_lea.vmem [#allocation4], %s360
        %p362 = pneg %p248
        %p363 = pneg %p245
        %s364 = sand.u32 %s25, 1
        %s365 = scalar_lea.sflag [#allocation5], %s364
        %s366 = sand.u32 %s235, 1
        %s367 = scalar_lea.vmem [#allocation6], %s366
        %s368 = sadd.s32 %s29, %s30
        %p369 = scmp.lt.s32.totalorder %s368, 0
        %s370 = scalar_select %p369, %s368, 0
        %p371 = scmp.lt.s32.totalorder %s370, 0
        %s372 = scalar_select %p371, %s370, 0
        %s373 = smul.addr %s372, 8
        %s374 = scalar_lea.vmem %s0, %s373
        %s375 = sadd.s32 %s29, %s30
        %p376 = scmp.lt.s32.totalorder %s375, 0
        %s377 = scalar_select %p376, %s375, 0
        %s378 = sadd.s32 %s29, %s30
        %p379 = scmp.lt.s32.totalorder %s378, 0
        %s380 = scalar_select %p379, %s378, 0
        %p381 = scmp.lt.s32.totalorder %s380, 0
        %s382 = scalar_select %p381, %s380, 0
        %s383 = smul.addr %s382, 8
        %s384 = scalar_lea.vmem %s1, %s383
        %s385 = sadd.s32 %s29, %s30
        %p386 = scmp.lt.s32.totalorder %s385, 0
        %s387 = scalar_select %p386, %s385, 0
        %s388 = sadd.s32 %s29, %s30
        %p389 = scmp.lt.s32.totalorder %s388, 0
        %s390 = scalar_select %p389, %s388, 0
        %p391 = scmp.lt.s32.totalorder %s390, 0
        %s392 = scalar_select %p391, %s390, 0
        %s393 = smul.addr %s392, 8
        %s394 = scalar_lea.vmem %s2, %s393
        %s395 = sadd.s32 %s29, %s30
        %p396 = scmp.lt.s32.totalorder %s395, 0
        %s397 = scalar_select %p396, %s395, 0
        %p398 = scmp.eq.s32.totalorder %s30, 0
        // Predicated region
        $region41: #{tpu_custom_call.1} parent=39 // pred_check
          %p399 = pneg %p398
        $region42: #{tpu_custom_call.1} parent=39 // pred_check_branch
          %401 = sbr.rel (%p399) target = $region44
        $region43: #{tpu_custom_call.1} parent=39 // pred_region
          %vm402 = vcmask 122880
          %403 = vst.msk [vmem:[%s355] sm:$0x1] %vm402, 0.0
          %404 = vst.msk [vmem:[%s361] sm:$0x1] %vm402, 0.0
          %405 = vst.msk [vmem:[%s367] sm:$0x1] %vm402, 0.0
        $region44: #{tpu_custom_call.1} parent=39 // pred_fallthru
          _
        %s406 = sadd.s32 %s29, %s30
        %v407 = vld [vmem:[%s374] sm:$0xff]
        %v408 = vld [vmem:[%s384] sm:$0xff]
        %v409 = vcvt.s32.f32 %v408
        %v410 = vld [vmem:[%s394] sm:$0xff]
        %v411 = vld [vmem:[%s3] sm:$0x3]
        %v412 = vld [vmem:[%s4] sm:$0x1]
        %s413 = smul.u32 %s406, 8
        %v414 = vlaneseq
        %v415 = vshrl.u32 %v414, 7
        %v416 = vstv %s413
        %v417 = vadd.s32 %v416, %v415
        %vm418 = vcmp.lt.s32.totalorder %v417, 8
        %v419 = vsel %vm418, 1, 0
        %vm420 = vcmp.eq.s32.totalorder %v419, 1
        %v421 = vsel %vm420, %v409, -1.0
        %v422 = vsel %vm420, %v410, 0.0
        %vm423 = vcmask 15360
        %v425 = vsel %vm423, %v421, 0
        %vm427 = vcmask 1041408
        %v429 = vsel %vm427, %v411, 0
        %431 = vmatpush.msra.mxu0 0.0
        %432 = vmatpush.msra.mxu0 0.0
        %433 = vmatpush.msra.mxu0 0.0
        %434 = vmatpush.msra.mxu0 0.0
        %435 = vmatpush.msra.mxu0 0.0
        %436 = vmatpush.msra.mxu0 0.0
        %437 = vmatpush.msra.mxu0 0.0
        %438 = vmatpush.msra.mxu0 0.0
        %439 = vmatpush.msra.mxu0 0.0
        %440 = vmatpush.msra.mxu0 0.0
        %441 = vmatpush.msra.mxu0 0.0
        %442 = vmatpush.msra.mxu0 0.0
        %443 = vmatpush.msra.mxu0 0.0
        %444 = vmatpush.msra.mxu0 0.0
        %445 = vmatpush.msra.mxu0 0.0
        %446 = vmatpush.msra.mxu0 %v429
        %447 = vmatmul.f32.gmra.mxu0 %v425
        %v448 = vpop.f32.mrf.mxu0
        %v449 = vadd.f32 0.0, %v448
        %450 = vdwg.mxu0
        %v452 = vsel %vm423, %v422, 0
        %454 = vmatpush.msra.mxu0 0.0
        %455 = vmatpush.msra.mxu0 0.0
        %456 = vmatpush.msra.mxu0 0.0
        %457 = vmatpush.msra.mxu0 0.0
        %458 = vmatpush.msra.mxu0 0.0
        %459 = vmatpush.msra.mxu0 0.0
        %460 = vmatpush.msra.mxu0 0.0
        %461 = vmatpush.msra.mxu0 0.0
        %462 = vmatpush.msra.mxu0 0.0
        %463 = vmatpush.msra.mxu0 0.0
        %464 = vmatpush.msra.mxu0 0.0
        %465 = vmatpush.msra.mxu0 0.0
        %466 = vmatpush.msra.mxu0 0.0
        %467 = vmatpush.msra.mxu0 0.0
        %468 = vmatpush.msra.mxu0 0.0
        %469 = vmatpush.msra.mxu0 %v429
        %470 = vmatmul.f32.gmra.mxu0 %v452
        %v471 = vpop.f32.mrf.mxu0
        %v472 = vadd.f32 0.0, %v471
        %473 = vdwg.mxu0
        %v475 = vperm.slane %v412, 0
        %vm477 = vcmp.eq.f32.partialorder %v475, %v449
        %v478 = vsel %vm420, %v407, 0.0
        %v479 = vmul.f32 %v478, %v472
        %v480 = vsel %vm477, %v479, 0.0
        %vm481 = vcmask 130048
        %v482 = vsel %vm481, %v480, 0.0
        %v483 = vrot.slane %v482, 4
        %v484 = vadd.f32 %v482, %v483
        %v485 = vrot.slane %v484, 2
        %v486 = vadd.f32 %v484, %v485
        %v487 = vrot.slane %v486, 1
        %v488 = vadd.f32 %v486, %v487
        %v489 = vsel %vm477, %v472, 0.0
        %v490 = vadd.f32 %v479, %v489
        %v491 = vsel %vm481, %v490, 0.0
        %v492 = vrot.slane %v491, 4
        %v493 = vadd.f32 %v491, %v492
        %v494 = vrot.slane %v493, 2
        %v495 = vadd.f32 %v493, %v494
        %v496 = vrot.slane %v495, 1
        %v497 = vadd.f32 %v495, %v496
        %v498 = vsel %vm477, 1.0, 0.0
        %v499 = vsel %vm481, %v498, 0.0
        %v500 = vrot.slane %v499, 4
        %v501 = vadd.f32 %v499, %v500
        %v502 = vrot.slane %v501, 2
        %v503 = vadd.f32 %v501, %v502
        %v504 = vrot.slane %v503, 1
        %v505 = vadd.f32 %v503, %v504
        %v506 = vld [vmem:[%s355] sm:$0x1]
        %v507 = vadd.f32 %v506, %v488
        %vm508 = vcmask 122880
        %509 = vst.msk [vmem:[%s355] sm:$0x1] %vm508, %v507
        %v510 = vld [vmem:[%s361] sm:$0x1]
        %v511 = vadd.f32 %v510, %v497
        %512 = vst.msk [vmem:[%s361] sm:$0x1] %vm508, %v511
        %v513 = vld [vmem:[%s367] sm:$0x1]
        %v514 = vadd.f32 %v513, %v505
        %515 = vst.msk [vmem:[%s367] sm:$0x1] %vm508, %v514
        %s516 = sand.u32 %s183, 1
        %s517 = scalar_lea.sflag [#allocation3], %s516
        %s518 = sand.u32 %s183, 1
        %s519 = scalar_lea.vmem [#allocation2], %s518
        %s520 = sand.u32 %s25, 1
        %s521 = scalar_lea.sflag [#allocation5], %s520
        %s522 = sand.u32 %s209, 1
        %s523 = scalar_lea.vmem [#allocation4], %s522
        %s524 = sand.u32 %s25, 1
        %s525 = scalar_lea.sflag [#allocation5], %s524
        %s526 = sand.u32 %s235, 1
        %s527 = scalar_lea.vmem [#allocation6], %s526
        // Predicated region
        $region45: #{tpu_custom_call.1} parent=39 // pred_check
          %p528 = pneg %p193
        $region46: #{tpu_custom_call.1} parent=39 // pred_check_branch
          %530 = sbr.rel (%p528) target = $region48
        $region47: #{tpu_custom_call.1} parent=39 // pred_region
          %532 = vsyncadd %s517, 0
          %s533 = scalar_lea.hbm %s5, %s29
          %s535 = sshll.u32 %s519, 4
          %s536 = int_to_ptr.vmem [resolvable:$true] %s535
          %s537 = sshll.u32 %s533, 4
          %s538 = int_to_ptr.hbm [resolvable:$true] %s537
          %540 = dma.vmem_to_hbm [thread:$0]  %s536, 16, %s538, %s517
        $region48: #{tpu_custom_call.1} parent=39 // pred_fallthru
          _
        // Predicated region
        $region49: #{tpu_custom_call.1} parent=39 // pred_check
          %p541 = pneg %p219
        $region50: #{tpu_custom_call.1} parent=39 // pred_check_branch
          %543 = sbr.rel (%p541) target = $region52
        $region51: #{tpu_custom_call.1} parent=39 // pred_region
          %545 = vsyncadd %s521, 0
          %s546 = scalar_lea.hbm %s6, %s29
          %s548 = sshll.u32 %s523, 4
          %s549 = int_to_ptr.vmem [resolvable:$true] %s548
          %s550 = sshll.u32 %s546, 4
          %s551 = int_to_ptr.hbm [resolvable:$true] %s550
          %553 = dma.vmem_to_hbm [thread:$0]  %s549, 16, %s551, %s521
        $region52: #{tpu_custom_call.1} parent=39 // pred_fallthru
          _
        // Predicated region
        $region53: #{tpu_custom_call.1} parent=39 // pred_check
          %p554 = pneg %p245
        $region54: #{tpu_custom_call.1} parent=39 // pred_check_branch
          %556 = sbr.rel (%p554) target = $region56
        $region55: #{tpu_custom_call.1} parent=39 // pred_region
          %558 = vsyncadd %s525, 0
          %s559 = scalar_lea.hbm %s7, %s29
          %s561 = sshll.u32 %s527, 4
          %s562 = int_to_ptr.vmem [resolvable:$true] %s561
          %s563 = sshll.u32 %s559, 4
          %s564 = int_to_ptr.hbm [resolvable:$true] %s563
          %566 = dma.vmem_to_hbm [thread:$0]  %s562, 16, %s564, %s525
        $region56: #{tpu_custom_call.1} parent=39 // pred_fallthru
          _
      $region40: #{tpu_custom_call.1} parent=5 // pred_fallthru
        _
      %p567 = scmp.le.s32.totalorder 2, %s20
      // Predicated region
      $region57: #{tpu_custom_call.1} parent=5 // pred_check
        %p568 = pneg %p567
      $region58: #{tpu_custom_call.1} parent=5 // pred_check_branch
        %570 = sbr.rel (%p568) target = $region60
      $region59: #{tpu_custom_call.1} parent=5 // pred_region
        %s571 = ssub.s32 %s20, 2
        // Predicated region
        $region61: #{tpu_custom_call.1} parent=59 // pred_check
          %p572 = pneg %p199
        $region62: #{tpu_custom_call.1} parent=59 // pred_check_branch
          %574 = sbr.rel (%p572) target = $region64
        $region63: #{tpu_custom_call.1} parent=59 // pred_region
          %s575 = sand.u32 %s184, 1
          %s576 = scalar_lea.sflag [#allocation3], %s575
          %s577 = sand.u32 %s184, 1
          %s578 = scalar_lea.vmem [#allocation2], %s577
          %580 = dma.done %s576, 16
        $region64: #{tpu_custom_call.1} parent=59 // pred_fallthru
          _
        // Predicated region
        $region65: #{tpu_custom_call.1} parent=59 // pred_check
          %p581 = pneg %p225
        $region66: #{tpu_custom_call.1} parent=59 // pred_check_branch
          %583 = sbr.rel (%p581) target = $region68
        $region67: #{tpu_custom_call.1} parent=59 // pred_region
          %s584 = sand.u32 %s26, 1
          %s585 = scalar_lea.sflag [#allocation5], %s584
          %s586 = sand.u32 %s210, 1
          %s587 = scalar_lea.vmem [#allocation4], %s586
          %589 = dma.done %s585, 16
        $region68: #{tpu_custom_call.1} parent=59 // pred_fallthru
          _
        // Predicated region
        $region69: #{tpu_custom_call.1} parent=59 // pred_check
          %p590 = pneg %p251
        $region70: #{tpu_custom_call.1} parent=59 // pred_check_branch
          %592 = sbr.rel (%p590) target = $region72
        $region71: #{tpu_custom_call.1} parent=59 // pred_region
          %s593 = sand.u32 %s26, 1
          %s594 = scalar_lea.sflag [#allocation5], %s593
          %s595 = sand.u32 %s236, 1
          %s596 = scalar_lea.vmem [#allocation6], %s595
          %598 = dma.done %s594, 16
        $region72: #{tpu_custom_call.1} parent=59 // pred_fallthru
          _
      $region60: #{tpu_custom_call.1} parent=5 // pred_fallthru
        _
    $region6: #{tpu_custom_call.1} parent=1 // loop_footer
      %s24 = sadd.s32 1, %s20
    $region7: #{tpu_custom_call.1} parent=1 // loop_footer_branch
      %19 = sbr.rel target = $region3
    $region8: #{tpu_custom_call.1} parent=1 // loop_exit
      _
    %599 = vsyncpa [#allocation3], 1
    %s600 = scalar_lea.sflag [#allocation3], 1
    %601 = vsyncpa %s600, 1
    %602 = vsyncpa [#allocation5], 1
    %s603 = scalar_lea.sflag [#allocation5], 1
    %604 = vsyncpa %s603, 1

</llo_original>
